<compile_context>
chip_gen: v7x
topology: tpu7x:2x2x1
jax: 0.10.0
libtpu: 0.0.40
codegen_flags: <defaults>
</compile_context>

<pallas_src>
import jax
import jax.numpy as jnp
from jax.experimental import pallas as pl
from jax.experimental.pallas import tpu as pltpu


def _round_up(x, m):
    return ((x + m - 1) // m) * m


def angle_encoder_kernel(x_ref, w1_ref, b1_ref, w2_ref, b2_ref, o_ref):
    x = x_ref[...]                                        # (TB, 2) f32
    # Layer 1 (Cin=2): two VPU broadcast FMAs instead of a >98%-zero-padded
    # MXU pass; keeps the MXU free for layer 2.
    h = (x[:, 0:1] * w1_ref[0:1, :]
         + x[:, 1:2] * w1_ref[1:2, :]
         + b1_ref[...])
    h = jnp.maximum(h, 0.0)                               # (TB, 32) f32
    # Layer 2: (TB, 32) @ (32, 1024) on the MXU, bf16 operands, f32 accum.
    y = jnp.dot(h.astype(jnp.bfloat16), w2_ref[...],
                preferred_element_type=jnp.float32)
    y = jnp.maximum(y + b2_ref[...], 0.0)                 # (TB, 1024) f32
    o_ref[...] = y.astype(o_ref.dtype)


def prep_params(w1, b1, w2, b2):
    """One-time parameter prep: dtype casts + bias row reshapes hoisted out of
    the per-call wrapper.  w2 is stored bf16 for the native MXU path."""
    return (w1.astype(jnp.float32),
            b1.reshape(1, 32).astype(jnp.float32),
            w2.astype(jnp.bfloat16),
            b2.reshape(1, 1024).astype(jnp.float32))


def angle_encoder(theta, w1, b1_row, w2, b2_row, *, block_b=1024,
                  out_dtype=jnp.bfloat16, vmem_limit_bytes=48 << 20):
    """theta: (B, 2, 1, 1) NCHW.  Returns (B, 512, 2, 1) in `out_dtype`.

    block_b: batch tile (rounded to a multiple of 8, capped at ceil8(B)).
    The grid is pl.cdiv(B, tb); the ragged last block is handled by Pallas
    with masked writes -- no pad/slice round trip of the output.
    """
    B = theta.shape[0]
    assert theta.shape[1:] == (2, 1, 1), "AngleEncoder expects (B, 2, 1, 1) input"
    x = theta.reshape(B, 2).astype(jnp.float32)

    # Batch tile: multiple of 8 (sublane), never larger than ceil8(B).
    tb = max(8, min(_round_up(block_b, 8), _round_up(B, 8)))
    grid = (pl.cdiv(B, tb),)

    out_itemsize = jnp.dtype(out_dtype).itemsize
    cost = pl.CostEstimate(
        flops=2 * B * (2 * 32 + 32 * 1024),
        transcendentals=0,
        bytes_accessed=(B * 2 * 4 + B * 1024 * out_itemsize
                        + 2 * 32 * 4 + 32 * 4 + 32 * 1024 * 2 + 1024 * 4),
    )

    out = pl.pallas_call(
        angle_encoder_kernel,
        out_shape=jax.ShapeDtypeStruct((B, 1024), out_dtype),
        grid_spec=pltpu.PrefetchScalarGridSpec(
            num_scalar_prefetch=0,
            grid=grid,
            in_specs=[
                pl.BlockSpec((tb, 2), lambda i: (i, 0)),        # x tile
                pl.BlockSpec((2, 32), lambda i: (0, 0)),        # w1 (resident)
                pl.BlockSpec((1, 32), lambda i: (0, 0)),        # b1 (resident)
                pl.BlockSpec((32, 1024), lambda i: (0, 0)),     # w2 (resident)
                pl.BlockSpec((1, 1024), lambda i: (0, 0)),      # b2 (resident)
            ],
            out_specs=pl.BlockSpec((tb, 1024), lambda i: (i, 0)),
        ),
        compiler_params=pltpu.CompilerParams(
            dimension_semantics=("parallel",),   # megacore on v7x; no-op elsewhere
            vmem_limit_bytes=vmem_limit_bytes,
        ),
        cost_estimate=cost,
    )(x, w1, b1_row, w2, b2_row)

    # .view(B, 512, 2, 1) on the NCHW (B, 1024, 1, 1) tensor: the 1024 channels
    # split row-major into (512, 2) -- identical to a plain reshape here.
    return out.reshape(B, 512, 2, 1)


def init_params(key):
    """Deterministic synthetic parameters matching nn.Conv2d shapes."""
    k1, k2, k3, k4 = jax.random.split(key, 4)
    # torch fv_1.weight: (32, 2, 1, 1) -> stored transposed as (2, 32)
    w1 = jax.random.normal(k1, (2, 32), jnp.float32) * 0.5
    b1 = jax.random.normal(k2, (32,), jnp.float32) * 0.1
    # torch fv_2.weight: (1024, 32, 1, 1) -> stored transposed as (32, 1024)
    w2 = jax.random.normal(k3, (32, 1024), jnp.float32) * 0.1
    b2 = jax.random.normal(k4, (1024,), jnp.float32) * 0.1
    return w1, b1, w2, b2


if __name__ == "__main__":
    key = jax.random.PRNGKey(0)
    kp, kx1, kx2 = jax.random.split(key, 3)
    w1, b1, w2, b2 = init_params(kp)
    w1p, b1p, w2p, b2p = prep_params(w1, b1, w2, b2)

    def ref_fn(theta):
        x = theta.reshape(theta.shape[0], 2)
        h = jnp.maximum(x @ w1 + b1, 0.0)
        y = jnp.maximum(h @ w2 + b2, 0.0)
        return y.reshape(theta.shape[0], 512, 2, 1)

    # bf16 MXU operands (+ bf16 output by default) -> bf16-level tolerance.
    TOL = dict(atol=3e-2, rtol=3e-2)

    # 1) Small batch, default bf16 output: single 8-row tile.
    B1 = 8
    theta1 = jax.random.normal(kx1, (B1, 2, 1, 1), jnp.float32)
    out1 = jax.block_until_ready(angle_encoder(theta1, w1p, b1p, w2p, b2p))
    assert out1.shape == (B1, 512, 2, 1) and out1.dtype == jnp.bfloat16
    assert jnp.allclose(out1.astype(jnp.float32), ref_fn(theta1), **TOL)

    # 2) Ragged multi-tile grid: B=40 with a 16-row tile -> cdiv = 3 steps,
    #    last block half out-of-bounds (masked writes, no pad/slice round
    #    trip).  Exercises the f32 output path too.
    B2 = 40
    theta2 = jax.random.normal(kx2, (B2, 2, 1, 1), jnp.float32)
    out2 = jax.block_until_ready(
        angle_encoder(theta2, w1p, b1p, w2p, b2p, block_b=16,
                      out_dtype=jnp.float32))
    assert out2.shape == (B2, 512, 2, 1) and out2.dtype == jnp.float32
    assert jnp.allclose(out2, ref_fn(theta2), **TOL)

    print("KERNEL_OK")
</pallas_src>

<mosaic_0001>
module attributes {stable_mosaic.version = 11 : i64} {
  func.func @angle_encoder_kernel(%arg0: i32, %arg1: memref<8x2xf32, #tpu.memory_space<vmem>>, %arg2: memref<2x32xf32, #tpu.memory_space<vmem>>, %arg3: memref<1x32xf32, #tpu.memory_space<vmem>>, %arg4: memref<32x1024xbf16, #tpu.memory_space<vmem>>, %arg5: memref<1x1024xf32, #tpu.memory_space<vmem>>, %arg6: memref<8x1024xbf16, #tpu.memory_space<vmem>>) attributes {dimension_semantics = [#tpu.dimension_semantics<parallel>], iteration_bounds = array<i64: 1>, scalar_prefetch = 0 : i64, scratch_operands = 0 : i64, tpu.core_type = #tpu.core_type<tc>, window_params = [{transform_indices = @transform_0, window_bounds = array<i64: 8, 2>}, {pipeline_mode = #tpu.pipeline_mode<synchronous>, transform_indices = @transform_1, window_bounds = array<i64: 2, 32>}, {pipeline_mode = #tpu.pipeline_mode<synchronous>, transform_indices = @transform_2, window_bounds = array<i64: 1, 32>}, {pipeline_mode = #tpu.pipeline_mode<synchronous>, transform_indices = @transform_3, window_bounds = array<i64: 32, 1024>}, {pipeline_mode = #tpu.pipeline_mode<synchronous>, transform_indices = @transform_4, window_bounds = array<i64: 1, 1024>}, {transform_indices = @transform_5, window_bounds = array<i64: 8, 1024>}]} {
    %c0 = arith.constant 0 : index
    %c0_0 = arith.constant 0 : index
    %0 = vector.load %arg1[%c0, %c0_0] : memref<8x2xf32, #tpu.memory_space<vmem>>, vector<8x2xf32>
    %1 = vector.extract_strided_slice %0 {offsets = [0, 0], sizes = [8, 1], strides = [1, 1]} : vector<8x2xf32> to vector<8x1xf32>
    %c0_1 = arith.constant 0 : index
    %c0_2 = arith.constant 0 : index
    %2 = vector.load %arg2[%c0_1, %c0_2] : memref<2x32xf32, #tpu.memory_space<vmem>>, vector<1x32xf32>
    %3 = vector.broadcast %1 : vector<8x1xf32> to vector<8x32xf32>
    %4 = vector.broadcast %2 : vector<1x32xf32> to vector<8x32xf32>
    %5 = arith.mulf %3, %4 : vector<8x32xf32>
    %6 = vector.extract_strided_slice %0 {offsets = [0, 1], sizes = [8, 1], strides = [1, 1]} : vector<8x2xf32> to vector<8x1xf32>
    %c1 = arith.constant 1 : index
    %c0_3 = arith.constant 0 : index
    %7 = vector.load %arg2[%c1, %c0_3] : memref<2x32xf32, #tpu.memory_space<vmem>>, vector<1x32xf32>
    %8 = vector.broadcast %6 : vector<8x1xf32> to vector<8x32xf32>
    %9 = vector.broadcast %7 : vector<1x32xf32> to vector<8x32xf32>
    %10 = arith.mulf %8, %9 : vector<8x32xf32>
    %11 = arith.addf %5, %10 : vector<8x32xf32>
    %c0_4 = arith.constant 0 : index
    %c0_5 = arith.constant 0 : index
    %12 = vector.load %arg3[%c0_4, %c0_5] : memref<1x32xf32, #tpu.memory_space<vmem>>, vector<1x32xf32>
    %13 = vector.broadcast %12 : vector<1x32xf32> to vector<8x32xf32>
    %14 = arith.addf %11, %13 : vector<8x32xf32>
    %cst = arith.constant 0.000000e+00 : f32
    %15 = vector.broadcast %cst : f32 to vector<8x32xf32>
    %16 = arith.maximumf %14, %15 : vector<8x32xf32>
    %17 = arith.truncf %16 : vector<8x32xf32> to vector<8x32xbf16>
    %c0_6 = arith.constant 0 : index
    %c0_7 = arith.constant 0 : index
    %18 = vector.load %arg4[%c0_6, %c0_7] : memref<32x1024xbf16, #tpu.memory_space<vmem>>, vector<32x1024xbf16>
    %cst_8 = arith.constant dense<0.000000e+00> : vector<8x1024xf32>
    %19 = tpu.matmul %17, %18, %cst_8 {dimension_numbers = #tpu.dot_dimension_numbers<[1], [0], [0], [1], [0, 0, 1, 1], [], []>} : vector<8x32xbf16>, vector<32x1024xbf16>, vector<8x1024xf32> -> vector<8x1024xf32>
    %c0_9 = arith.constant 0 : index
    %c0_10 = arith.constant 0 : index
    %20 = vector.load %arg5[%c0_9, %c0_10] : memref<1x1024xf32, #tpu.memory_space<vmem>>, vector<1x1024xf32>
    %21 = vector.broadcast %20 : vector<1x1024xf32> to vector<8x1024xf32>
    %22 = arith.addf %19, %21 : vector<8x1024xf32>
    %cst_11 = arith.constant 0.000000e+00 : f32
    %23 = vector.broadcast %cst_11 : f32 to vector<8x1024xf32>
    %24 = arith.maximumf %22, %23 : vector<8x1024xf32>
    %25 = arith.truncf %24 : vector<8x1024xf32> to vector<8x1024xbf16>
    %c0_12 = arith.constant 0 : index
    %c0_13 = arith.constant 0 : index
    %26 = vector.load %arg6[%c0_12, %c0_13] : memref<8x1024xbf16, #tpu.memory_space<vmem>>, vector<8x1024xbf16>
    tpu.vector_store %arg6[%c0_12, %c0_13], %25 {strides = array<i32>} : memref<8x1024xbf16, #tpu.memory_space<vmem>>, vector<8x1024xbf16>,
    return
  }
  func.func @transform_0(%arg0: i32) -> (i32, i32) {
    %c0_i32 = arith.constant 0 : i32
    %c0_i32_0 = arith.constant 0 : i32
    return %arg0, %c0_i32 : i32, i32
  }
  func.func @transform_1(%arg0: i32) -> (i32, i32) {
    %c0_i32 = arith.constant 0 : i32
    %c0_i32_0 = arith.constant 0 : i32
    %c0_i32_1 = arith.constant 0 : i32
    return %c0_i32, %c0_i32_0 : i32, i32
  }
  func.func @transform_2(%arg0: i32) -> (i32, i32) {
    %c0_i32 = arith.constant 0 : i32
    %c0_i32_0 = arith.constant 0 : i32
    %c0_i32_1 = arith.constant 0 : i32
    return %c0_i32, %c0_i32_0 : i32, i32
  }
  func.func @transform_3(%arg0: i32) -> (i32, i32) {
    %c0_i32 = arith.constant 0 : i32
    %c0_i32_0 = arith.constant 0 : i32
    %c0_i32_1 = arith.constant 0 : i32
    return %c0_i32, %c0_i32_0 : i32, i32
  }
  func.func @transform_4(%arg0: i32) -> (i32, i32) {
    %c0_i32 = arith.constant 0 : i32
    %c0_i32_0 = arith.constant 0 : i32
    %c0_i32_1 = arith.constant 0 : i32
    return %c0_i32, %c0_i32_0 : i32, i32
  }
  func.func @transform_5(%arg0: i32) -> (i32, i32) {
    %c0_i32 = arith.constant 0 : i32
    %c0_i32_0 = arith.constant 0 : i32
    return %arg0, %c0_i32 : i32, i32
  }
}

</mosaic_0001>

<llo_original>
// kernel: tpu_custom_call.1
$region0: #{tpu_custom_call.1}
  #allocation0 [shape = 'u32[]', space=smem, size = 0x4, offset = 0x4, fixed_abs, tag = 'smem constant byte address 0x4 - core index']
  #allocation1 [shape = 'u32[144,128]{1,0:T(1,128)}', space=vmem, size = 0x12000, scoped, tag = 'internal scratch']
  %s0 = inlined_call_operand.vmem [shape: f32[8,2], index: 0, kind: input, shape index: {}]
  %s1 = inlined_call_operand.vmem [shape: f32[2,32], index: 1, kind: input, shape index: {}]
  %s2 = inlined_call_operand.vmem [shape: f32[1,32], index: 2, kind: input, shape index: {}]
  %s3 = inlined_call_operand.hbm [shape: bf16[32,1024], index: 3, kind: input, shape index: {}]
  %s4 = inlined_call_operand.vmem [shape: f32[1,1024], index: 4, kind: input, shape index: {}]
  %s5 = inlined_call_operand.hbm [shape: bf16[8,1024], index: 5, kind: output, shape index: {}]
  %s6 = sld [smem:[#allocation0]]
  $region34: #{tpu_custom_call.1} parent=0
    _
  %s8 = ssub.s32 1, %s6
  %s9 = scalar_select 0, %s8, %s6
  $region1: #{tpu_custom_call.1} parent=0
    #allocation2 [shape = 'u8[65536]{0}', space=vmem, size = 0x10000, scoped, tag = 'input window, operand 3, single buffered']
    #allocation3 [shape = 's32[1]{0}', space=sflag, size = 0x4, scoped, tag = 'scoped memory for tpu_custom_call.1']
    #allocation4 [shape = 's32[1]{0}', space=sflag, size = 0x4, scoped, tag = 'scoped memory for tpu_custom_call.1']
    #allocation5 [shape = 'u8[16384]{0}', space=vmem, size = 0x4000, scoped, tag = 'output window, operand 0, single buffered']
    %10 = vsyncpa [#allocation3], 0
    %11 = vsyncpa [#allocation4], 0
    // Predicated region
    $region2: #{tpu_custom_call.1} parent=1 // pred_check
      _
    $region3: #{tpu_custom_call.1} parent=1 // pred_check_branch
      %13 = sbr.rel (0) target = $region5
    $region4: #{tpu_custom_call.1} parent=1 // pred_region
      _
    $region5: #{tpu_custom_call.1} parent=1 // pred_fallthru
      _
    // Predicated region
    $region6: #{tpu_custom_call.1} parent=1 // pred_check
      _
    $region7: #{tpu_custom_call.1} parent=1 // pred_check_branch
      %15 = sbr.rel (0) target = $region9
    $region8: #{tpu_custom_call.1} parent=1 // pred_region
      _
    $region9: #{tpu_custom_call.1} parent=1 // pred_fallthru
      _
    // Predicated region
    $region10: #{tpu_custom_call.1} parent=1 // pred_check
      _
    $region11: #{tpu_custom_call.1} parent=1 // pred_check_branch
      %17 = sbr.rel (0) target = $region13
    $region12: #{tpu_custom_call.1} parent=1 // pred_region
      _
    $region13: #{tpu_custom_call.1} parent=1 // pred_fallthru
      _
    // Predicated region
    $region14: #{tpu_custom_call.1} parent=1 // pred_check
      _
    $region15: #{tpu_custom_call.1} parent=1 // pred_check_branch
      %19 = sbr.rel (0) target = $region17
    $region16: #{tpu_custom_call.1} parent=1 // pred_region
      %s21 = ssub.s32 2048, 2048
      %22 = vsyncadd [#allocation3], %s21
      %s23 = sshll.u32 [#allocation2], 4
      %s24 = int_to_ptr.vmem [resolvable:$true] %s23
      %29 = dma.hbm_to_vmem [thread:$0]  %s3, 2048, %s24, [#allocation3], 512, 512, 32
    $region17: #{tpu_custom_call.1} parent=1 // pred_fallthru
      _
    // Predicated region
    $region18: #{tpu_custom_call.1} parent=1 // pred_check
      _
    $region19: #{tpu_custom_call.1} parent=1 // pred_check_branch
      %31 = sbr.rel (0) target = $region21
    $region20: #{tpu_custom_call.1} parent=1 // pred_region
      _
    $region21: #{tpu_custom_call.1} parent=1 // pred_fallthru
      _
    // Predicated region
    $region22: #{tpu_custom_call.1} parent=1 // pred_check
      _
    $region23: #{tpu_custom_call.1} parent=1 // pred_check_branch
      %33 = sbr.rel (0) target = $region25
    $region24: #{tpu_custom_call.1} parent=1 // pred_region
      %34 = dma.done [#allocation3], 2048
    $region25: #{tpu_custom_call.1} parent=1 // pred_fallthru
      _
    %v36 = vld [vmem:[%s0] sm:$0xff]
    %v37 = vld [vmem:[%s1] sm:$0x1]
    %39 = vset.pattern.permute.xlu0 0
    %40 = vperm.xlu0 %39, %v36
    %v41 = vpop.permute.xlu0 %40
    %v43 = vlaneseq
    %v44 = vshrl.u32 %v43, 7
    %v45 = vsub.s32 0, %v44
    %v46 = vrot.slane %v37, %v45
    %v47 = vmul.f32 %v41, %v46
    %v48 = vld [vmem:[%s1 + $0x1] sm:$0x1]
    %49 = vset.pattern.permute.xlu0 1
    %50 = vperm.xlu0 %49, %v36
    %v51 = vpop.permute.xlu0 %50
    %v53 = vlaneseq
    %v54 = vshrl.u32 %v53, 7
    %v55 = vsub.s32 0, %v54
    %v56 = vrot.slane %v48, %v55
    %v57 = vmul.f32 %v51, %v56
    %v58 = vadd.f32 %v47, %v57
    %v59 = vld [vmem:[%s2] sm:$0x1]
    %v61 = vlaneseq
    %v62 = vshrl.u32 %v61, 7
    %v63 = vsub.s32 0, %v62
    %v64 = vrot.slane %v59, %v63
    %v66 = vadd.f32 %v58, %v64
    %v67 = vmax.f32 %v66, 0.0
    %v68 = vpack.c.bf16 %v67, %v67
    %v69 = vld [vmem:[#allocation2] sm:$0xff]
    %v70 = vld [vmem:[#allocation2 + $0x8] sm:$0xff]
    %v71 = vld [vmem:[#allocation2 + $0x10] sm:$0xff]
    %v72 = vld [vmem:[#allocation2 + $0x18] sm:$0xff]
    %v73 = vld [vmem:[#allocation2 + $0x20] sm:$0xff]
    %v74 = vld [vmem:[#allocation2 + $0x28] sm:$0xff]
    %v75 = vld [vmem:[#allocation2 + $0x30] sm:$0xff]
    %v76 = vld [vmem:[#allocation2 + $0x38] sm:$0xff]
    %v77 = vld [vmem:[#allocation2 + $0x40] sm:$0xff]
    %v78 = vld [vmem:[#allocation2 + $0x48] sm:$0xff]
    %v79 = vld [vmem:[#allocation2 + $0x50] sm:$0xff]
    %v80 = vld [vmem:[#allocation2 + $0x58] sm:$0xff]
    %v81 = vld [vmem:[#allocation2 + $0x60] sm:$0xff]
    %v82 = vld [vmem:[#allocation2 + $0x68] sm:$0xff]
    %v83 = vld [vmem:[#allocation2 + $0x70] sm:$0xff]
    %v84 = vld [vmem:[#allocation2 + $0x78] sm:$0xff]
    %v85 = vld [vmem:[%s4] sm:$0xff]
    %v87 = vlaneseq
    %v88 = vshrl.u32 %v87, 7
    %v89 = vsub.s32 0, %v88
    %v90 = vrot.slane %v85, %v89
    %v91 = vlaneseq
    %v92 = vshrl.u32 %v91, 7
    %v93 = vsub.s32 1, %v92
    %v94 = vrot.slane %v85, %v93
    %v95 = vlaneseq
    %v96 = vshrl.u32 %v95, 7
    %v97 = vsub.s32 2, %v96
    %v98 = vrot.slane %v85, %v97
    %v99 = vlaneseq
    %v100 = vshrl.u32 %v99, 7
    %v101 = vsub.s32 3, %v100
    %v102 = vrot.slane %v85, %v101
    %v103 = vlaneseq
    %v104 = vshrl.u32 %v103, 7
    %v105 = vsub.s32 4, %v104
    %v106 = vrot.slane %v85, %v105
    %v107 = vlaneseq
    %v108 = vshrl.u32 %v107, 7
    %v109 = vsub.s32 5, %v108
    %v110 = vrot.slane %v85, %v109
    %v111 = vlaneseq
    %v112 = vshrl.u32 %v111, 7
    %v113 = vsub.s32 6, %v112
    %v114 = vrot.slane %v85, %v113
    %v115 = vlaneseq
    %v116 = vshrl.u32 %v115, 7
    %v117 = vsub.s32 7, %v116
    %v118 = vrot.slane %v85, %v117
    %v143 = vunpack.c.l.b16 %v69
    %v144 = vunpack.c.h.b16 %v69
    %v145 = vunpack.c.l.b16 %v70
    %v146 = vunpack.c.h.b16 %v70
    %v147 = vunpack.c.l.b16 %v71
    %v148 = vunpack.c.h.b16 %v71
    %v149 = vunpack.c.l.b16 %v72
    %v150 = vunpack.c.h.b16 %v72
    %v151 = vunpack.c.l.b16 %v73
    %v152 = vunpack.c.h.b16 %v73
    %v153 = vunpack.c.l.b16 %v74
    %v154 = vunpack.c.h.b16 %v74
    %v155 = vunpack.c.l.b16 %v75
    %v156 = vunpack.c.h.b16 %v75
    %v157 = vunpack.c.l.b16 %v76
    %v158 = vunpack.c.h.b16 %v76
    %v159 = vunpack.c.l.b16 %v77
    %v160 = vunpack.c.h.b16 %v77
    %v161 = vunpack.c.l.b16 %v78
    %v162 = vunpack.c.h.b16 %v78
    %v163 = vunpack.c.l.b16 %v79
    %v164 = vunpack.c.h.b16 %v79
    %v165 = vunpack.c.l.b16 %v80
    %v166 = vunpack.c.h.b16 %v80
    %v167 = vunpack.c.l.b16 %v81
    %v168 = vunpack.c.h.b16 %v81
    %v169 = vunpack.c.l.b16 %v82
    %v170 = vunpack.c.h.b16 %v82
    %v171 = vunpack.c.l.b16 %v83
    %v172 = vunpack.c.h.b16 %v83
    %v173 = vunpack.c.l.b16 %v84
    %v174 = vunpack.c.h.b16 %v84
    %v175 = vpack.c.b16 %v151, %v143
    %v176 = vpack.c.b16 %v152, %v144
    %v177 = vpack.c.b16 %v153, %v145
    %v178 = vpack.c.b16 %v154, %v146
    %v179 = vpack.c.b16 %v155, %v147
    %v180 = vpack.c.b16 %v156, %v148
    %v181 = vpack.c.b16 %v157, %v149
    %v182 = vpack.c.b16 %v158, %v150
    %v183 = vpack.c.b16 %v167, %v159
    %v184 = vpack.c.b16 %v168, %v160
    %v185 = vpack.c.b16 %v169, %v161
    %v186 = vpack.c.b16 %v170, %v162
    %v187 = vpack.c.b16 %v171, %v163
    %v188 = vpack.c.b16 %v172, %v164
    %v189 = vpack.c.b16 %v173, %v165
    %v190 = vpack.c.b16 %v174, %v166
    %vm207 = vcmask 261120
    %v209 = vsel %vm207, %v68, 0
    %211 = vmatprep.subr.bf16.mxu0 %v176
    %212 = vmatpush1.bf16.msra.mxu0 %v175
    %213 = vmatprep.subr.bf16.mxu0 %v184
    %214 = vmatpush1.bf16.msra.mxu0 %v183
    %215 = vmatprep.subr.bf16.mxu0 0
    %216 = vmatpush1.bf16.msra.mxu0 0
    %217 = vmatprep.subr.bf16.mxu0 0
    %218 = vmatpush1.bf16.msra.mxu0 0
    %219 = vmatprep.subr.bf16.mxu0 0
    %220 = vmatpush1.bf16.msra.mxu0 0
    %221 = vmatprep.subr.bf16.mxu0 0
    %222 = vmatpush1.bf16.msra.mxu0 0
    %223 = vmatprep.subr.bf16.mxu0 0
    %224 = vmatpush1.bf16.msra.mxu0 0
    %225 = vmatprep.subr.bf16.mxu0 0
    %226 = vmatpush1.bf16.msra.mxu0 0
    %227 = vmatprep.subr.bf16.mxu0 0
    %228 = vmatpush1.bf16.msra.mxu0 0
    %229 = vmatprep.subr.bf16.mxu0 0
    %230 = vmatpush1.bf16.msra.mxu0 0
    %231 = vmatprep.subr.bf16.mxu0 0
    %232 = vmatpush1.bf16.msra.mxu0 0
    %233 = vmatprep.subr.bf16.mxu0 0
    %234 = vmatpush1.bf16.msra.mxu0 0
    %235 = vmatprep.subr.bf16.mxu0 0
    %236 = vmatpush1.bf16.msra.mxu0 0
    %237 = vmatprep.subr.bf16.mxu0 0
    %238 = vmatpush1.bf16.msra.mxu0 0
    %239 = vmatprep.subr.bf16.mxu0 0
    %240 = vmatpush1.bf16.msra.mxu0 0
    %241 = vmatprep.subr.bf16.mxu0 0
    %242 = vmatpush1.bf16.msra.mxu0 0
    %243 = vmatprep.mubr.bf16.mxu0 0
    %244 = vmatmul.mubr.bf16.gmra.mrb[0].mxu0 %v209
    %v245 = vpop.f32.mrb[0].mxu0
    %v246 = vadd.f32 %v90, %v245
    %v247 = vpop.f32.mrb[0].mxu0
    %v248 = vadd.f32 %v94, %v247
    %v249 = vpop.f32.mrb[0].mxu0
    %v250 = vpop.f32.mrb[0].mxu0
    %251 = vdwg.mxu0
    %252 = vmatprep.subr.bf16.mxu0 %v178
    %253 = vmatpush1.bf16.msra.mxu0 %v177
    %254 = vmatprep.subr.bf16.mxu0 %v186
    %255 = vmatpush1.bf16.msra.mxu0 %v185
    %256 = vmatprep.subr.bf16.mxu0 0
    %257 = vmatpush1.bf16.msra.mxu0 0
    %258 = vmatprep.subr.bf16.mxu0 0
    %259 = vmatpush1.bf16.msra.mxu0 0
    %260 = vmatprep.subr.bf16.mxu0 0
    %261 = vmatpush1.bf16.msra.mxu0 0
    %262 = vmatprep.subr.bf16.mxu0 0
    %263 = vmatpush1.bf16.msra.mxu0 0
    %264 = vmatprep.subr.bf16.mxu0 0
    %265 = vmatpush1.bf16.msra.mxu0 0
    %266 = vmatprep.subr.bf16.mxu0 0
    %267 = vmatpush1.bf16.msra.mxu0 0
    %268 = vmatprep.subr.bf16.mxu0 0
    %269 = vmatpush1.bf16.msra.mxu0 0
    %270 = vmatprep.subr.bf16.mxu0 0
    %271 = vmatpush1.bf16.msra.mxu0 0
    %272 = vmatprep.subr.bf16.mxu0 0
    %273 = vmatpush1.bf16.msra.mxu0 0
    %274 = vmatprep.subr.bf16.mxu0 0
    %275 = vmatpush1.bf16.msra.mxu0 0
    %276 = vmatprep.subr.bf16.mxu0 0
    %277 = vmatpush1.bf16.msra.mxu0 0
    %278 = vmatprep.subr.bf16.mxu0 0
    %279 = vmatpush1.bf16.msra.mxu0 0
    %280 = vmatprep.subr.bf16.mxu0 0
    %281 = vmatpush1.bf16.msra.mxu0 0
    %282 = vmatprep.subr.bf16.mxu0 0
    %283 = vmatpush1.bf16.msra.mxu0 0
    %284 = vmatprep.mubr.bf16.mxu0 0
    %285 = vmatmul.mubr.bf16.gmra.mrb[0].mxu0 %v209
    %v286 = vpop.f32.mrb[0].mxu0
    %v287 = vadd.f32 %v98, %v286
    %v288 = vpop.f32.mrb[0].mxu0
    %v289 = vadd.f32 %v102, %v288
    %v290 = vpop.f32.mrb[0].mxu0
    %v291 = vpop.f32.mrb[0].mxu0
    %292 = vdwg.mxu0
    %293 = vmatprep.subr.bf16.mxu0 %v180
    %294 = vmatpush1.bf16.msra.mxu0 %v179
    %295 = vmatprep.subr.bf16.mxu0 %v188
    %296 = vmatpush1.bf16.msra.mxu0 %v187
    %297 = vmatprep.subr.bf16.mxu0 0
    %298 = vmatpush1.bf16.msra.mxu0 0
    %299 = vmatprep.subr.bf16.mxu0 0
    %300 = vmatpush1.bf16.msra.mxu0 0
    %301 = vmatprep.subr.bf16.mxu0 0
    %302 = vmatpush1.bf16.msra.mxu0 0
    %303 = vmatprep.subr.bf16.mxu0 0
    %304 = vmatpush1.bf16.msra.mxu0 0
    %305 = vmatprep.subr.bf16.mxu0 0
    %306 = vmatpush1.bf16.msra.mxu0 0
    %307 = vmatprep.subr.bf16.mxu0 0
    %308 = vmatpush1.bf16.msra.mxu0 0
    %309 = vmatprep.subr.bf16.mxu0 0
    %310 = vmatpush1.bf16.msra.mxu0 0
    %311 = vmatprep.subr.bf16.mxu0 0
    %312 = vmatpush1.bf16.msra.mxu0 0
    %313 = vmatprep.subr.bf16.mxu0 0
    %314 = vmatpush1.bf16.msra.mxu0 0
    %315 = vmatprep.subr.bf16.mxu0 0
    %316 = vmatpush1.bf16.msra.mxu0 0
    %317 = vmatprep.subr.bf16.mxu0 0
    %318 = vmatpush1.bf16.msra.mxu0 0
    %319 = vmatprep.subr.bf16.mxu0 0
    %320 = vmatpush1.bf16.msra.mxu0 0
    %321 = vmatprep.subr.bf16.mxu0 0
    %322 = vmatpush1.bf16.msra.mxu0 0
    %323 = vmatprep.subr.bf16.mxu0 0
    %324 = vmatpush1.bf16.msra.mxu0 0
    %325 = vmatprep.mubr.bf16.mxu0 0
    %326 = vmatmul.mubr.bf16.gmra.mrb[0].mxu0 %v209
    %v327 = vpop.f32.mrb[0].mxu0
    %v328 = vadd.f32 %v106, %v327
    %v329 = vpop.f32.mrb[0].mxu0
    %v330 = vadd.f32 %v110, %v329
    %v331 = vpop.f32.mrb[0].mxu0
    %v332 = vpop.f32.mrb[0].mxu0
    %333 = vdwg.mxu0
    %334 = vmatprep.subr.bf16.mxu0 %v182
    %335 = vmatpush1.bf16.msra.mxu0 %v181
    %336 = vmatprep.subr.bf16.mxu0 %v190
    %337 = vmatpush1.bf16.msra.mxu0 %v189
    %338 = vmatprep.subr.bf16.mxu0 0
    %339 = vmatpush1.bf16.msra.mxu0 0
    %340 = vmatprep.subr.bf16.mxu0 0
    %341 = vmatpush1.bf16.msra.mxu0 0
    %342 = vmatprep.subr.bf16.mxu0 0
    %343 = vmatpush1.bf16.msra.mxu0 0
    %344 = vmatprep.subr.bf16.mxu0 0
    %345 = vmatpush1.bf16.msra.mxu0 0
    %346 = vmatprep.subr.bf16.mxu0 0
    %347 = vmatpush1.bf16.msra.mxu0 0
    %348 = vmatprep.subr.bf16.mxu0 0
    %349 = vmatpush1.bf16.msra.mxu0 0
    %350 = vmatprep.subr.bf16.mxu0 0
    %351 = vmatpush1.bf16.msra.mxu0 0
    %352 = vmatprep.subr.bf16.mxu0 0
    %353 = vmatpush1.bf16.msra.mxu0 0
    %354 = vmatprep.subr.bf16.mxu0 0
    %355 = vmatpush1.bf16.msra.mxu0 0
    %356 = vmatprep.subr.bf16.mxu0 0
    %357 = vmatpush1.bf16.msra.mxu0 0
    %358 = vmatprep.subr.bf16.mxu0 0
    %359 = vmatpush1.bf16.msra.mxu0 0
    %360 = vmatprep.subr.bf16.mxu0 0
    %361 = vmatpush1.bf16.msra.mxu0 0
    %362 = vmatprep.subr.bf16.mxu0 0
    %363 = vmatpush1.bf16.msra.mxu0 0
    %364 = vmatprep.subr.bf16.mxu0 0
    %365 = vmatpush1.bf16.msra.mxu0 0
    %366 = vmatprep.mubr.bf16.mxu0 0
    %367 = vmatmul.mubr.bf16.gmra.mrb[0].mxu0 %v209
    %v368 = vpop.f32.mrb[0].mxu0
    %v369 = vadd.f32 %v114, %v368
    %v370 = vpop.f32.mrb[0].mxu0
    %v371 = vadd.f32 %v118, %v370
    %v372 = vpop.f32.mrb[0].mxu0
    %v373 = vpop.f32.mrb[0].mxu0
    %374 = vdwg.mxu0
    %v375 = vmax.f32 %v246, 0.0
    %v376 = vmax.f32 %v248, 0.0
    %v377 = vmax.f32 %v287, 0.0
    %v378 = vmax.f32 %v289, 0.0
    %v379 = vmax.f32 %v328, 0.0
    %v380 = vmax.f32 %v330, 0.0
    %v381 = vmax.f32 %v369, 0.0
    %v382 = vmax.f32 %v371, 0.0
    %v383 = vpack.c.bf16 %v375, %v375
    %v384 = vpack.c.bf16 %v376, %v376
    %v385 = vpack.c.bf16 %v377, %v377
    %v386 = vpack.c.bf16 %v378, %v378
    %v387 = vpack.c.bf16 %v379, %v379
    %v388 = vpack.c.bf16 %v380, %v380
    %v389 = vpack.c.bf16 %v381, %v381
    %v390 = vpack.c.bf16 %v382, %v382
    %v399 = vunpack.c.l.b16 %v383
    %v400 = vunpack.c.l.b16 %v384
    %v401 = vunpack.c.l.b16 %v385
    %v402 = vunpack.c.l.b16 %v386
    %v403 = vunpack.c.l.b16 %v387
    %v404 = vunpack.c.l.b16 %v388
    %v405 = vunpack.c.l.b16 %v389
    %v406 = vunpack.c.l.b16 %v390
    %v407 = vpack.c.b16 %v400, %v399
    %v408 = vpack.c.b16 %v402, %v401
    %v409 = vpack.c.b16 %v404, %v403
    %v410 = vpack.c.b16 %v406, %v405
    %415 = vst [vmem:[#allocation5] sm:$0xff] %v407
    %416 = vst [vmem:[#allocation5 + $0x8] sm:$0xff] %v408
    %417 = vst [vmem:[#allocation5 + $0x10] sm:$0xff] %v409
    %418 = vst [vmem:[#allocation5 + $0x18] sm:$0xff] %v410
    // Predicated region
    $region26: #{tpu_custom_call.1} parent=1 // pred_check
      _
    $region27: #{tpu_custom_call.1} parent=1 // pred_check_branch
      %420 = sbr.rel (0) target = $region29
    $region28: #{tpu_custom_call.1} parent=1 // pred_region
      %s422 = ssub.s32 512, 512
      %423 = vsyncadd [#allocation4], %s422
      %s425 = sshll.u32 [#allocation5], 4
      %s426 = int_to_ptr.vmem [resolvable:$true] %s425
      %428 = dma.vmem_to_hbm [thread:$0]  %s426, 512, %s5, [#allocation4]
    $region29: #{tpu_custom_call.1} parent=1 // pred_fallthru
      _
    // Predicated region
    $region30: #{tpu_custom_call.1} parent=1 // pred_check
      _
    $region31: #{tpu_custom_call.1} parent=1 // pred_check_branch
      %430 = sbr.rel (0) target = $region33
    $region32: #{tpu_custom_call.1} parent=1 // pred_region
      %431 = dma.done [#allocation4], 512
    $region33: #{tpu_custom_call.1} parent=1 // pred_fallthru
      _
    %432 = vsyncpa [#allocation3], 1
    %433 = vsyncpa [#allocation4], 1

</llo_original>
